<compile_context>
chip_gen: v5e
topology: v5e:2x2
jax: 0.10.0
libtpu: 0.0.40
codegen_flags: <defaults>
</compile_context>

<pallas_src>
import jax
import jax.numpy as jnp
from jax.experimental import pallas as pl
from jax.experimental.pallas import tpu as pltpu


# ----------------------------- Pallas kernel --------------------------------
def vit_embed_kernel(patches_ref, w_ref, fused_ref, out_ref):
    """One grid step = `b_tile` images, full (N+1)-row sequence.

    patches_ref: (b_tile, Np, K) compute-dtype; row 0 of every image is zeros
                 (cls placeholder) so one matmul covers the whole sequence.
    w_ref:       (K, D)          compute-dtype, VMEM-resident (constant index).
    fused_ref:   (Np, D) f32     row 0 = cls_token + pos[0];
                                 rows 1: = pos[1:] + conv bias.  Resident.
    out_ref:     (b_tile, Np, D)
    """
    w = w_ref[...]
    fused = fused_ref[...]
    # b_tile is small and static: an unrolled loop keeps each dot a plain 2-D
    # MXU matmul with f32 accumulation.
    for i in range(patches_ref.shape[0]):
        proj = jnp.dot(patches_ref[i], w, preferred_element_type=jnp.float32)
        out_ref[i] = (proj + fused).astype(out_ref.dtype)


def _pick_b_tile(batch, per_image_bytes, resident_bytes,
                 vmem_budget=24 * 1024 * 1024, max_b=8):
    """Largest divisor of `batch` that (a) fits a double-buffered VMEM budget and
    (b) keeps >= 2 grid steps when batch >= 2 (v7x has two TensorCores)."""
    best = 1
    for t in range(1, min(batch, max_b) + 1):
        if batch % t:
            continue
        if batch >= 2 and batch // t < 2:
            continue
        if resident_bytes + 2 * t * per_image_bytes > vmem_budget:
            continue
        best = t
    return best


# ------------------------------ wrapper --------------------------------------
def vit_embeddings(x, conv_w, conv_b, cls_token, pos_emb, patch_size,
                   compute_dtype=jnp.bfloat16, out_dtype=None):
    """x: [B, C, H, W] NCHW (torch convention).  Returns [B, N+1, D]."""
    B, C, H, W = x.shape
    P = patch_size
    gh, gw = H // P, W // P
    N = gh * gw
    D = conv_w.shape[0]
    K = C * P * P
    Np = N + 1
    if out_dtype is None:
        out_dtype = conv_w.dtype          # model/param dtype, not image dtype

    expected_patches = pos_emb.shape[1] - 1
    if N != expected_patches:
        # TODO(synk): bicubic interpolation of position embeddings for images
        # larger than config.image_size is not implemented.
        raise NotImplementedError(
            "position-embedding interpolation (image larger than config.image_size)")

    # Patchify NCHW -> (B, Np, K) with pixel order (c, kh, kw); row 0 is a zero
    # "cls" pixel row so the kernel's matmul covers the whole sequence.  The
    # cast + transpose + reshape + pad fuse into one XLA relayout.
    # TODO(synk): express the patch extraction through the in_spec (read NCHW
    # slabs directly, regroup in-kernel) to remove this pre-kernel HBM round trip.
    xb = x.astype(compute_dtype)
    patches = xb.reshape(B, C, gh, P, gw, P)
    patches = patches.transpose(0, 2, 4, 1, 3, 5).reshape(B, N, K)
    patches = jnp.pad(patches, ((0, 0), (1, 0), (0, 0)))                 # (B, Np, K)

    # Conv2d weight (out, in, kh, kw) -> plain matmul weight (K, D).
    w_mat = conv_w.reshape(D, K).T.astype(compute_dtype)

    # Fused additive term (one tiny host-side O(Np*D) add), kept resident in VMEM.
    pos = pos_emb.reshape(Np, D).astype(jnp.float32)
    fused = jnp.concatenate(
        [pos[0:1] + cls_token.reshape(1, D).astype(jnp.float32),
         pos[1:] + conv_b.reshape(1, D).astype(jnp.float32)],
        axis=0)                                                          # (Np, D) f32

    cbytes = jnp.dtype(compute_dtype).itemsize
    obytes = jnp.dtype(out_dtype).itemsize
    per_image_bytes = Np * K * cbytes + Np * D * obytes
    resident_bytes = 2 * (K * D * cbytes + Np * D * 4)   # w + fused (double-buffered)
    b_tile = _pick_b_tile(B, per_image_bytes, resident_bytes)
    grid = (B // b_tile,)

    out = pl.pallas_call(
        vit_embed_kernel,
        out_shape=jax.ShapeDtypeStruct((B, Np, D), out_dtype),
        grid_spec=pltpu.PrefetchScalarGridSpec(
            num_scalar_prefetch=0,
            grid=grid,
            in_specs=[
                pl.BlockSpec((b_tile, Np, K), lambda b: (b, 0, 0)),
                pl.BlockSpec((K, D), lambda b: (0, 0)),       # resident weight
                pl.BlockSpec((Np, D), lambda b: (0, 0)),      # resident fused add
            ],
            out_specs=pl.BlockSpec((b_tile, Np, D), lambda b: (b, 0, 0)),
        ),
        compiler_params=pltpu.CompilerParams(
            dimension_semantics=("parallel",),
            vmem_limit_bytes=64 * 1024 * 1024),
    )(patches, w_mat, fused)
    return out


# ------------------------------ reference ------------------------------------
def vit_embeddings_ref(x, conv_w, conv_b, cls_token, pos_emb, patch_size):
    B, C, H, W = x.shape
    P = patch_size
    proj = jax.lax.conv_general_dilated(
        x, conv_w, window_strides=(P, P), padding="VALID",
        dimension_numbers=("NCHW", "OIHW", "NCHW"))
    proj = proj + conv_b[None, :, None, None]
    B_, D, gh, gw = proj.shape
    patch_emb = proj.reshape(B_, D, gh * gw).transpose(0, 2, 1)          # (B, N, D)
    cls = jnp.broadcast_to(cls_token, (B_, 1, D))
    seq = jnp.concatenate([cls, patch_emb], axis=1)                      # (B, N+1, D)
    return seq + pos_emb


# -------------------------------- main ----------------------------------------
if __name__ == "__main__":
    # Small ViT-like config: image 16x16, patch 4 -> 16 patches, hidden 32, 4 channels.
    batch = 2
    num_channels = 4
    image_size = 16
    patch_size = 4
    hidden = 32
    num_patches = (image_size // patch_size) ** 2

    key = jax.random.PRNGKey(0)
    kx, kw, kb, kc, kp = jax.random.split(key, 5)

    x = jax.random.normal(kx, (batch, num_channels, image_size, image_size),
                          dtype=jnp.float32)
    conv_w = (0.02 * jax.random.normal(
        kw, (hidden, num_channels, patch_size, patch_size), dtype=jnp.float32))
    conv_b = 0.02 * jax.random.normal(kb, (hidden,), dtype=jnp.float32)
    cls_token = jax.random.normal(kc, (1, 1, hidden), dtype=jnp.float32)
    pos_emb = jax.random.normal(kp, (1, num_patches + 1, hidden), dtype=jnp.float32)

    out = vit_embeddings(x, conv_w, conv_b, cls_token, pos_emb, patch_size)
    out = jax.block_until_ready(out)

    ref = vit_embeddings_ref(x, conv_w, conv_b, cls_token, pos_emb, patch_size)
    assert out.shape == (batch, num_patches + 1, hidden)
    # bf16 matmul inputs (f32 accumulate) -> compare with bf16-appropriate tolerance.
    assert jnp.allclose(out, ref, atol=2e-2, rtol=2e-2), "mismatch vs reference"

    print("KERNEL_OK")
</pallas_src>

<mosaic_0001>
module attributes {stable_mosaic.version = 11 : i64} {
  func.func @vit_embed_kernel(%arg0: i32, %arg1: memref<1x17x64xbf16, #tpu.memory_space<vmem>>, %arg2: memref<64x32xbf16, #tpu.memory_space<vmem>>, %arg3: memref<17x32xf32, #tpu.memory_space<vmem>>, %arg4: memref<1x17x32xf32, #tpu.memory_space<vmem>>) attributes {dimension_semantics = [#tpu.dimension_semantics<parallel>], iteration_bounds = array<i64: 2>, scalar_prefetch = 0 : i64, scratch_operands = 0 : i64, tpu.core_type = #tpu.core_type<tc>, window_params = [{transform_indices = @transform_0, window_bounds = array<i64: 1, 17, 64>}, {pipeline_mode = #tpu.pipeline_mode<synchronous>, transform_indices = @transform_1, window_bounds = array<i64: 64, 32>}, {pipeline_mode = #tpu.pipeline_mode<synchronous>, transform_indices = @transform_2, window_bounds = array<i64: 17, 32>}, {transform_indices = @transform_3, window_bounds = array<i64: 1, 17, 32>}]} {
    %c0 = arith.constant 0 : index
    %c0_0 = arith.constant 0 : index
    %0 = vector.load %arg2[%c0, %c0_0] : memref<64x32xbf16, #tpu.memory_space<vmem>>, vector<64x32xbf16>
    %c0_1 = arith.constant 0 : index
    %c0_2 = arith.constant 0 : index
    %1 = vector.load %arg3[%c0_1, %c0_2] : memref<17x32xf32, #tpu.memory_space<vmem>>, vector<17x32xf32>
    %c0_3 = arith.constant 0 : index
    %c0_4 = arith.constant 0 : index
    %c0_5 = arith.constant 0 : index
    %2 = vector.load %arg1[%c0_3, %c0_4, %c0_5] : memref<1x17x64xbf16, #tpu.memory_space<vmem>>, vector<1x17x64xbf16>
    %3 = vector.shape_cast %2 : vector<1x17x64xbf16> to vector<17x64xbf16>
    %cst = arith.constant dense<0.000000e+00> : vector<17x32xf32>
    %4 = tpu.matmul %3, %0, %cst {dimension_numbers = #tpu.dot_dimension_numbers<[1], [0], [0], [1], [0, 0, 1, 1], [], []>} : vector<17x64xbf16>, vector<64x32xbf16>, vector<17x32xf32> -> vector<17x32xf32>
    %5 = arith.addf %4, %1 : vector<17x32xf32>
    %c0_6 = arith.constant 0 : index
    %c0_7 = arith.constant 0 : index
    %c0_8 = arith.constant 0 : index
    %6 = vector.load %arg4[%c0_6, %c0_7, %c0_8] : memref<1x17x32xf32, #tpu.memory_space<vmem>>, vector<1x17x32xf32>
    %7 = vector.shape_cast %6 : vector<1x17x32xf32> to vector<17x32xf32>
    %8 = vector.shape_cast %5 : vector<17x32xf32> to vector<1x17x32xf32>
    tpu.vector_store %arg4[%c0_6, %c0_7, %c0_8], %8 {strides = array<i32>} : memref<1x17x32xf32, #tpu.memory_space<vmem>>, vector<1x17x32xf32>,
    return
  }
  func.func @transform_0(%arg0: i32) -> (i32, i32, i32) {
    %c0_i32 = arith.constant 0 : i32
    %c0_i32_0 = arith.constant 0 : i32
    %c0_i32_1 = arith.constant 0 : i32
    return %arg0, %c0_i32, %c0_i32_0 : i32, i32, i32
  }
  func.func @transform_1(%arg0: i32) -> (i32, i32) {
    %c0_i32 = arith.constant 0 : i32
    %c0_i32_0 = arith.constant 0 : i32
    %c0_i32_1 = arith.constant 0 : i32
    return %c0_i32, %c0_i32_0 : i32, i32
  }
  func.func @transform_2(%arg0: i32) -> (i32, i32) {
    %c0_i32 = arith.constant 0 : i32
    %c0_i32_0 = arith.constant 0 : i32
    %c0_i32_1 = arith.constant 0 : i32
    return %c0_i32, %c0_i32_0 : i32, i32
  }
  func.func @transform_3(%arg0: i32) -> (i32, i32, i32) {
    %c0_i32 = arith.constant 0 : i32
    %c0_i32_0 = arith.constant 0 : i32
    %c0_i32_1 = arith.constant 0 : i32
    return %arg0, %c0_i32, %c0_i32_0 : i32, i32, i32
  }
}

</mosaic_0001>

<llo_original>
// kernel: tpu_custom_call.1
$region0: #{tpu_custom_call.1}
  #allocation0 [shape = 'u32[]', space=smem, size = 0x4, offset = 0x4, fixed_abs, tag = 'smem constant byte address 0x4 - core index']
  #allocation1 [shape = 'u32[72,128]{1,0:T(1,128)}', space=vmem, size = 0x9000, scoped, tag = 'internal scratch']
  %s0 = inlined_call_operand.vmem [shape: bf16[2,17,64], index: 0, kind: input, shape index: {}]
  %s1 = inlined_call_operand.vmem [shape: bf16[64,32], index: 1, kind: input, shape index: {}]
  %s2 = inlined_call_operand.vmem [shape: f32[17,32], index: 2, kind: input, shape index: {}]
  %s3 = inlined_call_operand.vmem [shape: f32[2,17,32], index: 3, kind: output, shape index: {}]
  %s4 = sld [smem:[#allocation0]]
  $region45: #{tpu_custom_call.1} parent=0
    _
  %s6 = ssub.s32 1, %s4
  %s7 = scalar_select 0, %s6, %s4
  loop: start=0, step=1, limit=4
  $region2: #{tpu_custom_call.1} parent=0 // loop_pre_header
    _
  $region3: #{tpu_custom_call.1} parent=0 // loop_header
    %s9 = sphi 0, %s13
    %p10 = scmp.ge.s32.totalorder %s9, 4
    %s19 = sphi 0, %s21
    %s22 = sphi 0, %s19
    %s23 = sphi 0, %s22
    %s39 = sphi 0, %s23
    %s43 = sphi 0, %s43
    %s45 = sphi 0, %s43
    %s46 = sphi 0, %s45
    %s60 = sphi 0, %s46
    %s64 = sphi 0, %s64
    %s66 = sphi 0, %s64
    %s67 = sphi 0, %s66
    %s81 = sphi 0, %s67
    %s87 = sphi 0, %s89
    %s90 = sphi 0, %s87
    %s91 = sphi 0, %s90
    %s107 = sphi 0, %s91
  $region4: #{tpu_custom_call.1} parent=0 // loop_header_branch
    %12 = sbr.rel (%p10) target = $region8
  $region5: #{tpu_custom_call.1} parent=0 // loop_body
    %s14 = ssub.s32 %s9, 1
    %s15 = ssub.s32 %s9, 2
    %s16 = sadd.s32 %s9, 1
    %s17 = ssub.s32 %s9, %s16
    %p18 = scmp.eq.s32.totalorder %s17, 0
    %s20 = sadd.s32 %s19, 1
    %s21 = scalar_select %p18, %s19, %s20
    %p24 = pneg %p18
    %p25 = scmp.eq.s32.totalorder %s9, 1
    %p26 = por %p24, %p25
    %p27 = scmp.ne.s32.totalorder %s19, %s22
    %p28 = scmp.eq.s32.totalorder %s9, 0
    %p29 = por %p27, %p28
    %p30 = scmp.ne.s32.totalorder %s19, %s22
    %p31 = scmp.eq.s32.totalorder %s14, 1
    %p32 = por %p30, %p31
    %p33 = scmp.ne.s32.totalorder %s22, %s23
    %p34 = scmp.eq.s32.totalorder %s14, 0
    %p35 = por %p33, %p34
    %p36 = scmp.ne.s32.totalorder %s22, %s23
    %p37 = scmp.eq.s32.totalorder %s15, 1
    %p38 = por %p36, %p37
    %p40 = scmp.ne.s32.totalorder %s23, %s39
    %p41 = scmp.eq.s32.totalorder %s15, 0
    %p42 = por %p40, %p41
    %s44 = sadd.s32 %s43, 1
    %p47 = scmp.eq.s32.totalorder %s9, 1
    %p48 = scmp.ne.s32.totalorder %s43, %s45
    %p49 = scmp.eq.s32.totalorder %s9, 0
    %p50 = por %p48, %p49
    %p51 = scmp.ne.s32.totalorder %s43, %s45
    %p52 = scmp.eq.s32.totalorder %s14, 1
    %p53 = por %p51, %p52
    %p54 = scmp.ne.s32.totalorder %s45, %s46
    %p55 = scmp.eq.s32.totalorder %s14, 0
    %p56 = por %p54, %p55
    %p57 = scmp.ne.s32.totalorder %s45, %s46
    %p58 = scmp.eq.s32.totalorder %s15, 1
    %p59 = por %p57, %p58
    %p61 = scmp.ne.s32.totalorder %s46, %s60
    %p62 = scmp.eq.s32.totalorder %s15, 0
    %p63 = por %p61, %p62
    %s65 = sadd.s32 %s64, 1
    %p68 = scmp.eq.s32.totalorder %s9, 1
    %p69 = scmp.ne.s32.totalorder %s64, %s66
    %p70 = scmp.eq.s32.totalorder %s9, 0
    %p71 = por %p69, %p70
    %p72 = scmp.ne.s32.totalorder %s64, %s66
    %p73 = scmp.eq.s32.totalorder %s14, 1
    %p74 = por %p72, %p73
    %p75 = scmp.ne.s32.totalorder %s66, %s67
    %p76 = scmp.eq.s32.totalorder %s14, 0
    %p77 = por %p75, %p76
    %p78 = scmp.ne.s32.totalorder %s66, %s67
    %p79 = scmp.eq.s32.totalorder %s15, 1
    %p80 = por %p78, %p79
    %p82 = scmp.ne.s32.totalorder %s67, %s81
    %p83 = scmp.eq.s32.totalorder %s15, 0
    %p84 = por %p82, %p83
    %s85 = ssub.s32 %s9, %s16
    %p86 = scmp.eq.s32.totalorder %s85, 0
    %s88 = sadd.s32 %s87, 1
    %s89 = scalar_select %p86, %s87, %s88
    %p92 = pneg %p86
    %p93 = scmp.eq.s32.totalorder %s9, 1
    %p94 = por %p92, %p93
    %p95 = scmp.ne.s32.totalorder %s87, %s90
    %p96 = scmp.eq.s32.totalorder %s9, 0
    %p97 = por %p95, %p96
    %p98 = scmp.ne.s32.totalorder %s87, %s90
    %p99 = scmp.eq.s32.totalorder %s14, 1
    %p100 = por %p98, %p99
    %p101 = scmp.ne.s32.totalorder %s90, %s91
    %p102 = scmp.eq.s32.totalorder %s14, 0
    %p103 = por %p101, %p102
    %p104 = scmp.ne.s32.totalorder %s90, %s91
    %p105 = scmp.eq.s32.totalorder %s15, 1
    %p106 = por %p104, %p105
    %p108 = scmp.ne.s32.totalorder %s91, %s107
    %p109 = scmp.eq.s32.totalorder %s15, 0
    %p110 = por %p108, %p109
    %p111 = scmp.le.s32.totalorder 1, %s9
    %p112 = scmp.lt.s32.totalorder %s9, 3
    %p113 = pnand %p111, %p112
    %p114 = pneg %p113
    // Predicated region
    $region9: #{tpu_custom_call.1} parent=5 // pred_check
      _
    $region10: #{tpu_custom_call.1} parent=5 // pred_check_branch
      %116 = sbr.rel (%p113) target = $region12
    $region11: #{tpu_custom_call.1} parent=5 // pred_region
      %s117 = ssub.s32 %s9, 1
      // Predicated region
      $region13: #{tpu_custom_call.1} parent=11 // pred_check
        %p118 = pneg %p56
      $region14: #{tpu_custom_call.1} parent=11 // pred_check_branch
        %120 = sbr.rel (%p118) target = $region16
      $region15: #{tpu_custom_call.1} parent=11 // pred_region
        _
      $region16: #{tpu_custom_call.1} parent=11 // pred_fallthru
        _
      // Predicated region
      $region17: #{tpu_custom_call.1} parent=11 // pred_check
        %p121 = pneg %p77
      $region18: #{tpu_custom_call.1} parent=11 // pred_check_branch
        %123 = sbr.rel (%p121) target = $region20
      $region19: #{tpu_custom_call.1} parent=11 // pred_region
        _
      $region20: #{tpu_custom_call.1} parent=11 // pred_fallthru
        _
    $region12: #{tpu_custom_call.1} parent=5 // pred_fallthru
      _
    %p124 = scmp.lt.s32.totalorder %s9, 2
    // Predicated region
    $region21: #{tpu_custom_call.1} parent=5 // pred_check
      %p125 = pneg %p124
    $region22: #{tpu_custom_call.1} parent=5 // pred_check_branch
      %127 = sbr.rel (%p125) target = $region24
    $region23: #{tpu_custom_call.1} parent=5 // pred_region
      // Predicated region
      $region25: #{tpu_custom_call.1} parent=23 // pred_check
        %p128 = pneg %p29
      $region26: #{tpu_custom_call.1} parent=23 // pred_check_branch
        %130 = sbr.rel (%p128) target = $region28
      $region27: #{tpu_custom_call.1} parent=23 // pred_region
        %p131 = scmp.lt.s32.totalorder %s9, 1
        %s132 = scalar_select %p131, %s9, 1
        %s133 = smul.addr %s132, 3
        %s134 = smul.addr %s133, 4
        %s135 = scalar_lea.vmem %s0, %s134
      $region28: #{tpu_custom_call.1} parent=23 // pred_fallthru
        _
    $region24: #{tpu_custom_call.1} parent=5 // pred_fallthru
      _
    %p136 = scmp.le.s32.totalorder 1, %s9
    %p137 = scmp.lt.s32.totalorder %s9, 3
    %p138 = pnand %p136, %p137
    %p139 = pneg %p138
    // Predicated region
    $region29: #{tpu_custom_call.1} parent=5 // pred_check
      _
    $region30: #{tpu_custom_call.1} parent=5 // pred_check_branch
      %141 = sbr.rel (%p138) target = $region32
    $region31: #{tpu_custom_call.1} parent=5 // pred_region
      %s142 = ssub.s32 %s9, 1
      %p143 = scmp.lt.s32.totalorder %s14, 1
      %s144 = scalar_select %p143, %s14, 1
      %s145 = smul.addr %s144, 3
      %s146 = smul.addr %s145, 4
      %s147 = scalar_lea.vmem %s0, %s146
      %p148 = pneg %p35
      %p149 = pneg %p32
      %p150 = pneg %p56
      %p151 = pneg %p53
      %p152 = pneg %p77
      %p153 = pneg %p74
      %p154 = pneg %p103
      %p155 = pneg %p100
      %p156 = scmp.lt.s32.totalorder %s14, 1
      %s157 = scalar_select %p156, %s14, 1
      %s158 = smul.addr %s157, 3
      %s159 = smul.addr %s158, 8
      %s160 = scalar_lea.vmem %s3, %s159
      %p161 = scmp.lt.s32.totalorder %s14, 1
      %s162 = scalar_select %p161, %s14, 1
      %s163 = smul.addr %s162, 3
      %s164 = smul.addr %s163, 4
      %s165 = scalar_lea.vmem %s0, %s164
      %p166 = scmp.lt.s32.totalorder %s14, 1
      %s167 = scalar_select %p166, %s14, 1
      %s168 = smul.addr %s167, 3
      %s169 = smul.addr %s168, 8
      %s170 = scalar_lea.vmem %s3, %s169
      %v172 = vld [vmem:[%s1] sm:$0xf]
      %v173 = vld [vmem:[%s1 + $0x4] sm:$0xf]
      %v174 = vld [vmem:[%s1 + $0x8] sm:$0xf]
      %v175 = vld [vmem:[%s1 + $0xc] sm:$0xf]
      %v176 = vld [vmem:[%s1 + $0x10] sm:$0xf]
      %v177 = vld [vmem:[%s1 + $0x14] sm:$0xf]
      %v178 = vld [vmem:[%s1 + $0x18] sm:$0xf]
      %v179 = vld [vmem:[%s1 + $0x1c] sm:$0xf]
      %v180 = vld [vmem:[%s2] sm:$0xff]
      %v181 = vld [vmem:[%s2 + $0x8] sm:$0xff]
      %v182 = vld [vmem:[%s2 + $0x10] sm:$0x1]
      %v183 = vld [vmem:[%s165] sm:$0xf]
      %v184 = vld [vmem:[%s165 + $0x4] sm:$0xf]
      %v185 = vld [vmem:[%s165 + $0x8] sm:$0x1]
      %v189 = vunpack.c.l.b16 %v183
      %v190 = vunpack.c.l.b16 %v184
      %v191 = vunpack.c.l.b16 %v185
      %v192 = vpack.c.b16 %v190, %v189
      %v193 = vpack.c.b16 %v191, %v191
      %v202 = vunpack.c.l.b16 %v172
      %v203 = vunpack.c.l.b16 %v173
      %v204 = vunpack.c.l.b16 %v174
      %v205 = vunpack.c.l.b16 %v175
      %v206 = vunpack.c.l.b16 %v176
      %v207 = vunpack.c.l.b16 %v177
      %v208 = vunpack.c.l.b16 %v178
      %v209 = vunpack.c.l.b16 %v179
      %v210 = vpack.c.b16 %v203, %v202
      %v211 = vpack.c.b16 %v205, %v204
      %v212 = vpack.c.b16 %v207, %v206
      %v213 = vpack.c.b16 %v209, %v208
      %vm218 = vcmask 523264
      %v220 = vsel %vm218, %v192, 0
      %v223 = vsel %vm218, %v193, 0
      %225 = vmatpush.bf16.msra.mxu0 0
      %226 = vmatpush.bf16.msra.mxu0 0
      %227 = vmatpush.bf16.msra.mxu0 0
      %228 = vmatpush.bf16.msra.mxu0 0
      %229 = vmatpush.bf16.msra.mxu0 %v213
      %230 = vmatpush.bf16.msra.mxu0 %v212
      %231 = vmatpush.bf16.msra.mxu0 %v211
      %232 = vmatpush.bf16.msra.mxu0 %v210
      %233 = vmatmul.bf16.gmra.mxu0 %v220
      %v234 = vpop.f32.mrf.mxu0
      %v235 = vadd.f32 %v180, %v234
      %v236 = vpop.f32.mrf.mxu0
      %v237 = vadd.f32 %v181, %v236
      %238 = vmatmul.bf16.gmra.mxu0 %v223
      %v239 = vpop.f32.mrf.mxu0
      %v240 = vadd.f32 %v182, %v239
      %v241 = vpop.f32.mrf.mxu0
      %242 = vdwg.mxu0
      %vm243 = vcmask 261120
      %244 = vst.msk [vmem:[%s170] sm:$0xff] %vm243, %v235
      %245 = vst.msk [vmem:[%s170 + $0x8] sm:$0xff] %vm243, %v237
      %vm246 = vcmask 253952
      %247 = vst.msk [vmem:[%s170 + $0x10] sm:$0x1] %vm246, %v240
      %p248 = scmp.lt.s32.totalorder %s14, 1
      %s249 = scalar_select %p248, %s14, 1
      %s250 = smul.addr %s249, 3
      %s251 = smul.addr %s250, 8
      %s252 = scalar_lea.vmem %s3, %s251
      // Predicated region
      $region33: #{tpu_custom_call.1} parent=31 // pred_check
        %p253 = pneg %p100
      $region34: #{tpu_custom_call.1} parent=31 // pred_check_branch
        %255 = sbr.rel (%p253) target = $region36
      $region35: #{tpu_custom_call.1} parent=31 // pred_region
        _
      $region36: #{tpu_custom_call.1} parent=31 // pred_fallthru
        _
    $region32: #{tpu_custom_call.1} parent=5 // pred_fallthru
      _
    %p256 = scmp.le.s32.totalorder 2, %s9
    // Predicated region
    $region37: #{tpu_custom_call.1} parent=5 // pred_check
      %p257 = pneg %p256
    $region38: #{tpu_custom_call.1} parent=5 // pred_check_branch
      %259 = sbr.rel (%p257) target = $region40
    $region39: #{tpu_custom_call.1} parent=5 // pred_region
      %s260 = ssub.s32 %s9, 2
      // Predicated region
      $region41: #{tpu_custom_call.1} parent=39 // pred_check
        %p261 = pneg %p106
      $region42: #{tpu_custom_call.1} parent=39 // pred_check_branch
        %263 = sbr.rel (%p261) target = $region44
      $region43: #{tpu_custom_call.1} parent=39 // pred_region
        %p264 = scmp.lt.s32.totalorder %s15, 1
        %s265 = scalar_select %p264, %s15, 1
        %s266 = smul.addr %s265, 3
        %s267 = smul.addr %s266, 8
        %s268 = scalar_lea.vmem %s3, %s267
      $region44: #{tpu_custom_call.1} parent=39 // pred_fallthru
        _
    $region40: #{tpu_custom_call.1} parent=5 // pred_fallthru
      _
  $region6: #{tpu_custom_call.1} parent=0 // loop_footer
    %s13 = sadd.s32 1, %s9
  $region7: #{tpu_custom_call.1} parent=0 // loop_footer_branch
    %8 = sbr.rel target = $region3
  $region8: #{tpu_custom_call.1} parent=0 // loop_exit
    _

</llo_original>
